<compile_context>
chip_gen: v5e
topology: v5e:2x2
jax: 0.10.0
libtpu: 0.0.40
codegen_flags: <defaults>
</compile_context>

<pallas_src>
import functools

import jax
import jax.numpy as jnp
from jax.experimental import pallas as pl
from jax.experimental.pallas import tpu as pltpu

LANE = 128  # TPU lane width; all padded dims are multiples of this.


# ------------------------------ helpers -------------------------------------
def _round_up(d, m):
    return ((d + m - 1) // m) * m


def _pad2d(x, rows, cols):
    r, c = x.shape
    if r == rows and c == cols:
        return x
    return jnp.pad(x, ((0, rows - r), (0, cols - c)))


def _choose_node_tiles(n):
    """Pick (tm, tk, n_pad): reduction tile tk is the largest 128*2^k <= round_up(n,128);
    row tile tm <= 512 divides tk; node dim padded up to a multiple of tk so both
    tiles divide it exactly (extra zero rows/cols in A_hat are harmless)."""
    n128 = _round_up(n, LANE)
    tk = LANE
    for cand in (2048, 1024, 512, 256, 128):
        if cand <= n128:
            tk = cand
            break
    tm = min(512, tk)   # keep >= 2 row tiles for large graphs (v7x core sharding)
    n_pad = _round_up(n, tk)
    return tm, tk, n_pad


# ----------------------------- Pallas kernels --------------------------------
def _fused_gcn_kernel(a_ref, h_ref, w_ref, b_ref, o_ref, *, n_layers):
    """Whole GCN stack in one kernel (small graphs): everything VMEM-resident, f32."""
    a = a_ref[...]
    h = h_ref[...]
    for l in range(n_layers):
        xw = jnp.dot(h, w_ref[l], preferred_element_type=jnp.float32)
        y = jnp.dot(a, xw, preferred_element_type=jnp.float32) + b_ref[l][0:1, :]
        if l < n_layers - 1:
            y = jnp.maximum(y, 0.0)
        h = y
    o_ref[...] = h.astype(o_ref.dtype)


def _gcn_layer_kernel(a_ref, h_ref, w_ref, b_ref, o_ref, acc_ref, *, apply_relu):
    """One GraphConv layer, tiled over (dst-row i, src-reduction k).

    W is resident in VMEM; XW for the current k-tile is recomputed on the fly
    (cheap: the kernel is HBM-bound on the N^2 A_hat stream), so the XW
    intermediate never touches HBM.  Bias + ReLU only in the finalize branch.
    """
    k = pl.program_id(1)

    @pl.when(k == 0)
    def _():
        acc_ref[...] = jnp.zeros_like(acc_ref)

    xw = jnp.dot(h_ref[...], w_ref[...], preferred_element_type=jnp.float32)
    acc_ref[...] += jnp.dot(a_ref[...], xw.astype(jnp.bfloat16),
                            preferred_element_type=jnp.float32)

    @pl.when(k == pl.num_programs(1) - 1)
    def _():
        y = acc_ref[...] + b_ref[0:1, :]
        if apply_relu:
            y = jnp.maximum(y, 0.0)
        o_ref[...] = y.astype(o_ref.dtype)


# ----------------------------- kernel wrappers --------------------------------
def pallas_gcn_layer(a_p, h_p, w_p, b_p, *, apply_relu, out_dtype, tm, tk):
    """Y = relu?(A_hat @ (H @ W) + b) for one layer (large-graph path)."""
    m, n_src = a_p.shape
    fin = h_p.shape[1]
    fout = w_p.shape[1]
    assert m % tm == 0 and n_src % tk == 0

    out_bytes = jnp.dtype(out_dtype).itemsize
    footprint = (2 * tm * tk * 2          # A tiles (bf16, double buffered)
                 + 2 * tk * fin * 2       # H tiles
                 + 2 * fin * fout * 2     # W (resident; conservative x2)
                 + 2 * 8 * fout * 4       # bias slab
                 + 2 * tm * fout * out_bytes
                 + tm * fout * 4)         # f32 accumulator
    # Cap at 48 MiB so the same plan fits v7x's 64 MiB per-TC VMEM.
    vmem_limit = min(48 << 20, max(16 << 20, int(footprint * 1.25) + (4 << 20)))

    kernel = functools.partial(_gcn_layer_kernel, apply_relu=apply_relu)
    return pl.pallas_call(
        kernel,
        out_shape=jax.ShapeDtypeStruct((m, fout), out_dtype),
        grid_spec=pltpu.PrefetchScalarGridSpec(
            num_scalar_prefetch=0,
            grid=(m // tm, n_src // tk),
            in_specs=[
                pl.BlockSpec((tm, tk), lambda i, kk: (i, kk)),    # A_hat tile
                pl.BlockSpec((tk, fin), lambda i, kk: (kk, 0)),   # H k-tile (full width)
                pl.BlockSpec((fin, fout), lambda i, kk: (0, 0)),  # W resident
                pl.BlockSpec((8, fout), lambda i, kk: (0, 0)),    # bias (epilogue)
            ],
            # tn == full padded F_out -> no j axis; A_hat streamed exactly once.
            out_specs=pl.BlockSpec((tm, fout), lambda i, kk: (i, 0)),
            scratch_shapes=[pltpu.VMEM((tm, fout), jnp.float32)],
        ),
        compiler_params=pltpu.CompilerParams(
            dimension_semantics=("parallel", "arbitrary"),
            vmem_limit_bytes=vmem_limit),
    )(a_p, h_p, w_p, b_p)


def pallas_gcn_fused(a_p, h_p, w_stack, b_stack, *, n_layers):
    """All layers in a single pallas_call (small graphs, everything in VMEM)."""
    n_pad, dp = h_p.shape
    kernel = functools.partial(_fused_gcn_kernel, n_layers=n_layers)
    return pl.pallas_call(
        kernel,
        out_shape=jax.ShapeDtypeStruct((n_pad, dp), jnp.float32),
        in_specs=[pl.BlockSpec(memory_space=pltpu.MemorySpace.VMEM)] * 4,
        out_specs=pl.BlockSpec(memory_space=pltpu.MemorySpace.VMEM),
    )(a_p, h_p, w_stack, b_stack)


# ------------------------------ Model glue ------------------------------------
def normalize_adjacency(adj):
    """A_hat = D_in^{-1/2} A D_out^{-1/2}, degrees clamped to >= 1 (DGL norm='both')."""
    out_deg = jnp.maximum(adj.sum(axis=0), 1.0)  # out-degree of source node j
    in_deg = jnp.maximum(adj.sum(axis=1), 1.0)   # in-degree of destination node i
    return adj * (in_deg[:, None] ** -0.5) * (out_deg[None, :] ** -0.5)


class GNNModelPallas:
    """JAX/Pallas port of GNNModel (gnn_layer='gcn')."""

    # Small-graph fused-path thresholds (whole stack resident in VMEM).
    FUSED_MAX_NPAD = 1024
    FUSED_MAX_DPAD = 512
    FUSED_MAX_LAYERS = 8

    def __init__(self, gnn_layer, n_layers, layer_dim, input_feature_dim, n_classes, key):
        assert n_layers >= 1, "GNN must have at least one layer"
        if gnn_layer != "gcn":
            # TODO(synk): 'gat' (GATConv) and 'sage' (SAGEConv) variants not implemented.
            raise ValueError(f"unsupported gnn layer type {gnn_layer}")
        dims = [input_feature_dim] + [layer_dim] * (n_layers - 1) + [n_classes]
        self.dims = dims
        self.n_layers = len(dims) - 1
        self.dims_pad = [_round_up(d, LANE) for d in dims]
        self.d_max_pad = max(self.dims_pad)

        self.weights_f32, self.biases_f32 = [], []   # unpadded reference params
        self.weights_bf16, self.biases_pad = [], []  # layer-wise kernel params
        w_stack, b_stack = [], []                    # fused-path stacked params
        for idx in range(self.n_layers):
            key, wk = jax.random.split(key)
            fan_in, fan_out = dims[idx], dims[idx + 1]
            # Deterministic Glorot/Xavier uniform init (matches DGL reset_parameters).
            limit = (6.0 / (fan_in + fan_out)) ** 0.5
            w = jax.random.uniform(wk, (fan_in, fan_out), jnp.float32, -limit, limit)
            b = jnp.zeros((fan_out,), jnp.float32)
            self.weights_f32.append(w)
            self.biases_f32.append(b)

            fi_p, fo_p = self.dims_pad[idx], self.dims_pad[idx + 1]
            self.weights_bf16.append(_pad2d(w, fi_p, fo_p).astype(jnp.bfloat16))
            b_slab = jnp.zeros((8, fo_p), jnp.float32).at[0, :fan_out].set(b)
            self.biases_pad.append(b_slab)

            w_stack.append(_pad2d(w, self.d_max_pad, self.d_max_pad))
            b_stack.append(jnp.zeros((8, self.d_max_pad), jnp.float32)
                           .at[0, :fan_out].set(b))
        self.w_stack = jnp.stack(w_stack)   # (L, Dp, Dp) f32
        self.b_stack = jnp.stack(b_stack)   # (L, 8, Dp) f32

        # JIT the whole forward (pads/casts fuse, dispatches pipeline).
        self._forward = jax.jit(self._forward_impl)
        self._forward_layer = jax.jit(self._forward_layerwise)

    # -- dispatch ---------------------------------------------------------------
    def __call__(self, a_hat, features):
        return self._forward(a_hat, features)

    def _forward_impl(self, a_hat, features):
        n = features.shape[0]
        n_pad128 = _round_up(n, LANE)
        if (n_pad128 <= self.FUSED_MAX_NPAD
                and self.d_max_pad <= self.FUSED_MAX_DPAD
                and self.n_layers <= self.FUSED_MAX_LAYERS):
            return self._forward_fused(a_hat, features)
        return self._forward_layerwise(a_hat, features)

    # -- small-graph fused path (one pallas_call, f32, all-resident) -------------
    def _forward_fused(self, a_hat, features):
        n = features.shape[0]
        n_pad = _round_up(n, LANE)
        # Padded rows/cols of A_hat are zero, so padded nodes never contaminate
        # valid outputs; padded feature columns stay zero through every layer.
        a_p = _pad2d(a_hat, n_pad, n_pad).astype(jnp.float32)
        h_p = _pad2d(features, n_pad, self.d_max_pad).astype(jnp.float32)
        out = pallas_gcn_fused(a_p, h_p, self.w_stack, self.b_stack,
                               n_layers=self.n_layers)
        return out[:n, :self.dims[-1]]

    # -- large-graph layer-wise path (one fused pallas_call per layer) -----------
    def _forward_layerwise(self, a_hat, features):
        n = features.shape[0]
        tm, tk, n_pad = _choose_node_tiles(n)
        # TODO(synk): on v7x, cast a_p to fp8 (e4m3) to halve the dominant HBM stream.
        a_p = _pad2d(a_hat, n_pad, n_pad).astype(jnp.bfloat16)
        h = _pad2d(features, n_pad, self.dims_pad[0]).astype(jnp.bfloat16)
        for idx in range(self.n_layers):
            last = idx == self.n_layers - 1
            h = pallas_gcn_layer(
                a_p, h, self.weights_bf16[idx], self.biases_pad[idx],
                apply_relu=not last,
                out_dtype=jnp.float32 if last else jnp.bfloat16,
                tm=tm, tk=tk)
        return h[:n, :self.dims[-1]].astype(jnp.float32)

    # -- pure-JAX f32 reference ---------------------------------------------------
    def reference(self, a_hat, features):
        h = features
        for idx, (w, b) in enumerate(zip(self.weights_f32, self.biases_f32)):
            h = a_hat @ (h @ w) + b[None, :]
            if idx < self.n_layers - 1:
                h = jnp.maximum(h, 0.0)
        return h


# --------------------------------- Main ---------------------------------------
if __name__ == "__main__":
    key = jax.random.PRNGKey(0)
    k_adj, k_feat, k_params = jax.random.split(key, 3)

    # Small synthetic graph.
    N = 16
    INPUT_FEATURE_DIM = 8
    LAYER_DIM = 32
    N_CLASSES = 4
    N_LAYERS = 3

    # Deterministic random directed graph (allow_zero_in_degree=True, so no
    # self-loop insertion is needed).
    adj = jax.random.bernoulli(k_adj, p=0.3, shape=(N, N)).astype(jnp.float32)
    a_hat = normalize_adjacency(adj)
    features = jax.random.normal(k_feat, (N, INPUT_FEATURE_DIM), dtype=jnp.float32)

    model = GNNModelPallas(
        gnn_layer="gcn",
        n_layers=N_LAYERS,
        layer_dim=LAYER_DIM,
        input_feature_dim=INPUT_FEATURE_DIM,
        n_classes=N_CLASSES,
        key=k_params,
    )

    ref = model.reference(a_hat, features)

    # Fused small-graph path (the default for this size): f32 all the way.
    out = jax.block_until_ready(model(a_hat, features))
    assert out.shape == (N, N_CLASSES), out.shape
    assert bool(jnp.all(jnp.isfinite(out)))
    assert bool(jnp.allclose(out, ref, rtol=5e-2, atol=5e-2)), (
        float(jnp.max(jnp.abs(out - ref))))

    # Also exercise the tiled layer-wise (large-graph) path: bf16 operands, f32 accum.
    out_lw = jax.block_until_ready(model._forward_layer(a_hat, features))
    assert out_lw.shape == (N, N_CLASSES), out_lw.shape
    assert bool(jnp.all(jnp.isfinite(out_lw)))
    assert bool(jnp.allclose(out_lw, ref, rtol=1e-1, atol=1e-1)), (
        float(jnp.max(jnp.abs(out_lw - ref))))

    print("KERNEL_OK")
</pallas_src>

<mosaic_0001>
module attributes {stable_mosaic.version = 11 : i64} {
  func.func @_fused_gcn_kernel(%arg0: memref<128x128xf32, #tpu.memory_space<vmem>>, %arg1: memref<128x128xf32, #tpu.memory_space<vmem>>, %arg2: memref<3x128x128xf32, #tpu.memory_space<vmem>>, %arg3: memref<3x8x128xf32, #tpu.memory_space<vmem>>, %arg4: memref<128x128xf32, #tpu.memory_space<vmem>>) attributes {dimension_semantics = [], scalar_prefetch = 0 : i64, scratch_operands = 0 : i64, tpu.core_type = #tpu.core_type<tc>} {
    %c0 = arith.constant 0 : index
    %c0_0 = arith.constant 0 : index
    %0 = vector.load %arg0[%c0, %c0_0] : memref<128x128xf32, #tpu.memory_space<vmem>>, vector<128x128xf32>
    %c0_1 = arith.constant 0 : index
    %c0_2 = arith.constant 0 : index
    %1 = vector.load %arg1[%c0_1, %c0_2] : memref<128x128xf32, #tpu.memory_space<vmem>>, vector<128x128xf32>
    %c0_3 = arith.constant 0 : index
    %c0_4 = arith.constant 0 : index
    %c0_5 = arith.constant 0 : index
    %2 = vector.load %arg2[%c0_3, %c0_4, %c0_5] : memref<3x128x128xf32, #tpu.memory_space<vmem>>, vector<1x128x128xf32>
    %3 = vector.shape_cast %2 : vector<1x128x128xf32> to vector<128x128xf32>
    %cst = arith.constant dense<0.000000e+00> : vector<128x128xf32>
    %4 = tpu.matmul %1, %3, %cst {dimension_numbers = #tpu.dot_dimension_numbers<[1], [0], [0], [1], [0, 0, 1, 1], [], []>} : vector<128x128xf32>, vector<128x128xf32>, vector<128x128xf32> -> vector<128x128xf32>
    %cst_6 = arith.constant dense<0.000000e+00> : vector<128x128xf32>
    %5 = tpu.matmul %0, %4, %cst_6 {dimension_numbers = #tpu.dot_dimension_numbers<[1], [0], [0], [1], [0, 0, 1, 1], [], []>} : vector<128x128xf32>, vector<128x128xf32>, vector<128x128xf32> -> vector<128x128xf32>
    %c0_7 = arith.constant 0 : index
    %c0_8 = arith.constant 0 : index
    %c0_9 = arith.constant 0 : index
    %6 = vector.load %arg3[%c0_7, %c0_8, %c0_9] : memref<3x8x128xf32, #tpu.memory_space<vmem>>, vector<1x8x128xf32>
    %7 = vector.shape_cast %6 : vector<1x8x128xf32> to vector<8x128xf32>
    %8 = vector.extract_strided_slice %7 {offsets = [0, 0], sizes = [1, 128], strides = [1, 1]} : vector<8x128xf32> to vector<1x128xf32>
    %9 = vector.broadcast %8 : vector<1x128xf32> to vector<128x128xf32>
    %10 = arith.addf %5, %9 : vector<128x128xf32>
    %cst_10 = arith.constant 0.000000e+00 : f32
    %11 = vector.broadcast %cst_10 : f32 to vector<128x128xf32>
    %12 = arith.maximumf %10, %11 : vector<128x128xf32>
    %c1 = arith.constant 1 : index
    %c0_11 = arith.constant 0 : index
    %c0_12 = arith.constant 0 : index
    %13 = vector.load %arg2[%c1, %c0_11, %c0_12] : memref<3x128x128xf32, #tpu.memory_space<vmem>>, vector<1x128x128xf32>
    %14 = vector.shape_cast %13 : vector<1x128x128xf32> to vector<128x128xf32>
    %cst_13 = arith.constant dense<0.000000e+00> : vector<128x128xf32>
    %15 = tpu.matmul %12, %14, %cst_13 {dimension_numbers = #tpu.dot_dimension_numbers<[1], [0], [0], [1], [0, 0, 1, 1], [], []>} : vector<128x128xf32>, vector<128x128xf32>, vector<128x128xf32> -> vector<128x128xf32>
    %cst_14 = arith.constant dense<0.000000e+00> : vector<128x128xf32>
    %16 = tpu.matmul %0, %15, %cst_14 {dimension_numbers = #tpu.dot_dimension_numbers<[1], [0], [0], [1], [0, 0, 1, 1], [], []>} : vector<128x128xf32>, vector<128x128xf32>, vector<128x128xf32> -> vector<128x128xf32>
    %c1_15 = arith.constant 1 : index
    %c0_16 = arith.constant 0 : index
    %c0_17 = arith.constant 0 : index
    %17 = vector.load %arg3[%c1_15, %c0_16, %c0_17] : memref<3x8x128xf32, #tpu.memory_space<vmem>>, vector<1x8x128xf32>
    %18 = vector.shape_cast %17 : vector<1x8x128xf32> to vector<8x128xf32>
    %19 = vector.extract_strided_slice %18 {offsets = [0, 0], sizes = [1, 128], strides = [1, 1]} : vector<8x128xf32> to vector<1x128xf32>
    %20 = vector.broadcast %19 : vector<1x128xf32> to vector<128x128xf32>
    %21 = arith.addf %16, %20 : vector<128x128xf32>
    %cst_18 = arith.constant 0.000000e+00 : f32
    %22 = vector.broadcast %cst_18 : f32 to vector<128x128xf32>
    %23 = arith.maximumf %21, %22 : vector<128x128xf32>
    %c2 = arith.constant 2 : index
    %c0_19 = arith.constant 0 : index
    %c0_20 = arith.constant 0 : index
    %24 = vector.load %arg2[%c2, %c0_19, %c0_20] : memref<3x128x128xf32, #tpu.memory_space<vmem>>, vector<1x128x128xf32>
    %25 = vector.shape_cast %24 : vector<1x128x128xf32> to vector<128x128xf32>
    %cst_21 = arith.constant dense<0.000000e+00> : vector<128x128xf32>
    %26 = tpu.matmul %23, %25, %cst_21 {dimension_numbers = #tpu.dot_dimension_numbers<[1], [0], [0], [1], [0, 0, 1, 1], [], []>} : vector<128x128xf32>, vector<128x128xf32>, vector<128x128xf32> -> vector<128x128xf32>
    %cst_22 = arith.constant dense<0.000000e+00> : vector<128x128xf32>
    %27 = tpu.matmul %0, %26, %cst_22 {dimension_numbers = #tpu.dot_dimension_numbers<[1], [0], [0], [1], [0, 0, 1, 1], [], []>} : vector<128x128xf32>, vector<128x128xf32>, vector<128x128xf32> -> vector<128x128xf32>
    %c2_23 = arith.constant 2 : index
    %c0_24 = arith.constant 0 : index
    %c0_25 = arith.constant 0 : index
    %28 = vector.load %arg3[%c2_23, %c0_24, %c0_25] : memref<3x8x128xf32, #tpu.memory_space<vmem>>, vector<1x8x128xf32>
    %29 = vector.shape_cast %28 : vector<1x8x128xf32> to vector<8x128xf32>
    %30 = vector.extract_strided_slice %29 {offsets = [0, 0], sizes = [1, 128], strides = [1, 1]} : vector<8x128xf32> to vector<1x128xf32>
    %31 = vector.broadcast %30 : vector<1x128xf32> to vector<128x128xf32>
    %32 = arith.addf %27, %31 : vector<128x128xf32>
    %c0_26 = arith.constant 0 : index
    %c0_27 = arith.constant 0 : index
    %33 = vector.load %arg4[%c0_26, %c0_27] : memref<128x128xf32, #tpu.memory_space<vmem>>, vector<128x128xf32>
    tpu.vector_store %arg4[%c0_26, %c0_27], %32 {strides = array<i32>} : memref<128x128xf32, #tpu.memory_space<vmem>>, vector<128x128xf32>,
    return
  }
}

</mosaic_0001>

<llo_original>
// kernel: _forward_impl.1
$region0: #{_forward_impl.1}
  #allocation0 [shape = 'u32[]', space=smem, size = 0x4, offset = 0x4, fixed_abs, tag = 'smem constant byte address 0x4 - core index']
  #allocation1 [shape = 'u32[72,128]{1,0:T(1,128)}', space=vmem, size = 0x9000, scoped, tag = 'internal scratch']
  %s0 = inlined_call_operand.vmem [shape: f32[128,128], index: 0, kind: input, shape index: {}]
  %s1 = inlined_call_operand.vmem [shape: f32[128,128], index: 1, kind: input, shape index: {}]
  %s2 = inlined_call_operand.hbm [shape: f32[3,128,128], index: 2, kind: input, shape index: {}]
  %s3 = inlined_call_operand.vmem [shape: f32[3,8,128], index: 3, kind: input, shape index: {}]
  %s4 = inlined_call_operand.vmem [shape: f32[128,128], index: 4, kind: output, shape index: {}]
  %s5 = sld [smem:[#allocation0]]
  $region30: #{_forward_impl.1} parent=0
    _
  %s7 = ssub.s32 1, %s5
  %s8 = scalar_select 0, %s7, %s5
  $region1: #{_forward_impl.1} parent=0
    #allocation2 [shape = 'u8[196608]{0}', space=vmem, size = 0x30000, scoped, tag = 'input window, operand 2, single buffered']
    #allocation3 [shape = 's32[1]{0}', space=sflag, size = 0x4, scoped, tag = 'scoped memory for _forward_impl.1']
    %9 = vsyncpa [#allocation3], 0
    // Predicated region
    $region2: #{_forward_impl.1} parent=1 // pred_check
      _
    $region3: #{_forward_impl.1} parent=1 // pred_check_branch
      %11 = sbr.rel (0) target = $region5
    $region4: #{_forward_impl.1} parent=1 // pred_region
      _
    $region5: #{_forward_impl.1} parent=1 // pred_fallthru
      _
    // Predicated region
    $region6: #{_forward_impl.1} parent=1 // pred_check
      _
    $region7: #{_forward_impl.1} parent=1 // pred_check_branch
      %13 = sbr.rel (0) target = $region9
    $region8: #{_forward_impl.1} parent=1 // pred_region
      _
    $region9: #{_forward_impl.1} parent=1 // pred_fallthru
      _
    // Predicated region
    $region10: #{_forward_impl.1} parent=1 // pred_check
      _
    $region11: #{_forward_impl.1} parent=1 // pred_check_branch
      %15 = sbr.rel (0) target = $region13
    $region12: #{_forward_impl.1} parent=1 // pred_region
      %17 = vsyncadd [#allocation3], 0
      %s18 = sshll.u32 %s2, 4
      %s19 = int_to_ptr.hbm [resolvable:$true] %s18
      %s20 = sshll.u32 [#allocation2], 4
      %s21 = int_to_ptr.vmem [resolvable:$true] %s20
      %26 = dma.hbm_to_vmem [thread:$0]  %s19, 6144, %s21, [#allocation3], 128, 128, 8
    $region13: #{_forward_impl.1} parent=1 // pred_fallthru
      _
    // Predicated region
    $region14: #{_forward_impl.1} parent=1 // pred_check
      _
    $region15: #{_forward_impl.1} parent=1 // pred_check_branch
      %28 = sbr.rel (0) target = $region17
    $region16: #{_forward_impl.1} parent=1 // pred_region
      _
    $region17: #{_forward_impl.1} parent=1 // pred_fallthru
      _
    // Predicated region
    $region18: #{_forward_impl.1} parent=1 // pred_check
      _
    $region19: #{_forward_impl.1} parent=1 // pred_check_branch
      %30 = sbr.rel (0) target = $region21
    $region20: #{_forward_impl.1} parent=1 // pred_region
      %32 = dma.done [#allocation3], 6144
    $region21: #{_forward_impl.1} parent=1 // pred_fallthru
      _
    %v33 = vld [vmem:[%s0] sm:$0xff]
    %v34 = vld [vmem:[%s0 + $0x8] sm:$0xff]
    %v35 = vld [vmem:[%s0 + $0x10] sm:$0xff]
    %v36 = vld [vmem:[%s0 + $0x18] sm:$0xff]
    %v37 = vld [vmem:[%s0 + $0x20] sm:$0xff]
    %v38 = vld [vmem:[%s0 + $0x28] sm:$0xff]
    %v39 = vld [vmem:[%s0 + $0x30] sm:$0xff]
    %v40 = vld [vmem:[%s0 + $0x38] sm:$0xff]
    %v41 = vld [vmem:[%s0 + $0x40] sm:$0xff]
    %v42 = vld [vmem:[%s0 + $0x48] sm:$0xff]
    %v43 = vld [vmem:[%s0 + $0x50] sm:$0xff]
    %v44 = vld [vmem:[%s0 + $0x58] sm:$0xff]
    %v45 = vld [vmem:[%s0 + $0x60] sm:$0xff]
    %v46 = vld [vmem:[%s0 + $0x68] sm:$0xff]
    %v47 = vld [vmem:[%s0 + $0x70] sm:$0xff]
    %v48 = vld [vmem:[%s0 + $0x78] sm:$0xff]
    %v49 = vld [vmem:[%s1] sm:$0xff]
    %v50 = vld [vmem:[%s1 + $0x8] sm:$0xff]
    %v51 = vld [vmem:[%s1 + $0x10] sm:$0xff]
    %v52 = vld [vmem:[%s1 + $0x18] sm:$0xff]
    %v53 = vld [vmem:[%s1 + $0x20] sm:$0xff]
    %v54 = vld [vmem:[%s1 + $0x28] sm:$0xff]
    %v55 = vld [vmem:[%s1 + $0x30] sm:$0xff]
    %v56 = vld [vmem:[%s1 + $0x38] sm:$0xff]
    %v57 = vld [vmem:[%s1 + $0x40] sm:$0xff]
    %v58 = vld [vmem:[%s1 + $0x48] sm:$0xff]
    %v59 = vld [vmem:[%s1 + $0x50] sm:$0xff]
    %v60 = vld [vmem:[%s1 + $0x58] sm:$0xff]
    %v61 = vld [vmem:[%s1 + $0x60] sm:$0xff]
    %v62 = vld [vmem:[%s1 + $0x68] sm:$0xff]
    %v63 = vld [vmem:[%s1 + $0x70] sm:$0xff]
    %v64 = vld [vmem:[%s1 + $0x78] sm:$0xff]
    %v65 = vld [vmem:[#allocation2] sm:$0xff]
    %v66 = vld [vmem:[#allocation2 + $0x8] sm:$0xff]
    %v67 = vld [vmem:[#allocation2 + $0x10] sm:$0xff]
    %v68 = vld [vmem:[#allocation2 + $0x18] sm:$0xff]
    %v69 = vld [vmem:[#allocation2 + $0x20] sm:$0xff]
    %v70 = vld [vmem:[#allocation2 + $0x28] sm:$0xff]
    %v71 = vld [vmem:[#allocation2 + $0x30] sm:$0xff]
    %v72 = vld [vmem:[#allocation2 + $0x38] sm:$0xff]
    %v73 = vld [vmem:[#allocation2 + $0x40] sm:$0xff]
    %v74 = vld [vmem:[#allocation2 + $0x48] sm:$0xff]
    %v75 = vld [vmem:[#allocation2 + $0x50] sm:$0xff]
    %v76 = vld [vmem:[#allocation2 + $0x58] sm:$0xff]
    %v77 = vld [vmem:[#allocation2 + $0x60] sm:$0xff]
    %v78 = vld [vmem:[#allocation2 + $0x68] sm:$0xff]
    %v79 = vld [vmem:[#allocation2 + $0x70] sm:$0xff]
    %v80 = vld [vmem:[#allocation2 + $0x78] sm:$0xff]
    %81 = vmatpush.msra.mxu0 %v80
    %82 = vmatpush.msra.mxu0 %v79
    %83 = vmatpush.msra.mxu0 %v78
    %84 = vmatpush.msra.mxu0 %v77
    %85 = vmatpush.msra.mxu0 %v76
    %86 = vmatpush.msra.mxu0 %v75
    %87 = vmatpush.msra.mxu0 %v74
    %88 = vmatpush.msra.mxu0 %v73
    %89 = vmatpush.msra.mxu0 %v72
    %90 = vmatpush.msra.mxu0 %v71
    %91 = vmatpush.msra.mxu0 %v70
    %92 = vmatpush.msra.mxu0 %v69
    %93 = vmatpush.msra.mxu0 %v68
    %94 = vmatpush.msra.mxu0 %v67
    %95 = vmatpush.msra.mxu0 %v66
    %96 = vmatpush.msra.mxu0 %v65
    %97 = vmatmul.f32.gmra.mxu0 %v49
    %v98 = vpop.f32.mrf.mxu0
    %v99 = vadd.f32 0.0, %v98
    %100 = vmatmul.f32.gmra.mxu0 %v50
    %v101 = vpop.f32.mrf.mxu0
    %v102 = vadd.f32 0.0, %v101
    %103 = vmatmul.f32.gmra.mxu0 %v51
    %v104 = vpop.f32.mrf.mxu0
    %v105 = vadd.f32 0.0, %v104
    %106 = vmatmul.f32.gmra.mxu0 %v52
    %v107 = vpop.f32.mrf.mxu0
    %v108 = vadd.f32 0.0, %v107
    %109 = vmatmul.f32.gmra.mxu0 %v53
    %v110 = vpop.f32.mrf.mxu0
    %v111 = vadd.f32 0.0, %v110
    %112 = vmatmul.f32.gmra.mxu0 %v54
    %v113 = vpop.f32.mrf.mxu0
    %v114 = vadd.f32 0.0, %v113
    %115 = vmatmul.f32.gmra.mxu0 %v55
    %v116 = vpop.f32.mrf.mxu0
    %v117 = vadd.f32 0.0, %v116
    %118 = vmatmul.f32.gmra.mxu0 %v56
    %v119 = vpop.f32.mrf.mxu0
    %v120 = vadd.f32 0.0, %v119
    %121 = vmatmul.f32.gmra.mxu0 %v57
    %v122 = vpop.f32.mrf.mxu0
    %v123 = vadd.f32 0.0, %v122
    %124 = vmatmul.f32.gmra.mxu0 %v58
    %v125 = vpop.f32.mrf.mxu0
    %v126 = vadd.f32 0.0, %v125
    %127 = vmatmul.f32.gmra.mxu0 %v59
    %v128 = vpop.f32.mrf.mxu0
    %v129 = vadd.f32 0.0, %v128
    %130 = vmatmul.f32.gmra.mxu0 %v60
    %v131 = vpop.f32.mrf.mxu0
    %v132 = vadd.f32 0.0, %v131
    %133 = vmatmul.f32.gmra.mxu0 %v61
    %v134 = vpop.f32.mrf.mxu0
    %v135 = vadd.f32 0.0, %v134
    %136 = vmatmul.f32.gmra.mxu0 %v62
    %v137 = vpop.f32.mrf.mxu0
    %v138 = vadd.f32 0.0, %v137
    %139 = vmatmul.f32.gmra.mxu0 %v63
    %v140 = vpop.f32.mrf.mxu0
    %v141 = vadd.f32 0.0, %v140
    %142 = vmatmul.f32.gmra.mxu0 %v64
    %v143 = vpop.f32.mrf.mxu0
    %v144 = vadd.f32 0.0, %v143
    %145 = vdwg.mxu0
    %v146 = vld [vmem:[%s3] sm:$0xff]
    %v147 = vperm.slane %v146, 0
    %148 = vmatpush.msra.mxu0 %v144
    %149 = vmatpush.msra.mxu0 %v141
    %150 = vmatpush.msra.mxu0 %v138
    %151 = vmatpush.msra.mxu0 %v135
    %152 = vmatpush.msra.mxu0 %v132
    %153 = vmatpush.msra.mxu0 %v129
    %154 = vmatpush.msra.mxu0 %v126
    %155 = vmatpush.msra.mxu0 %v123
    %156 = vmatpush.msra.mxu0 %v120
    %157 = vmatpush.msra.mxu0 %v117
    %158 = vmatpush.msra.mxu0 %v114
    %159 = vmatpush.msra.mxu0 %v111
    %160 = vmatpush.msra.mxu0 %v108
    %161 = vmatpush.msra.mxu0 %v105
    %162 = vmatpush.msra.mxu0 %v102
    %163 = vmatpush.msra.mxu0 %v99
    %164 = vmatmul.f32.gmra.mxu0 %v33
    %v165 = vpop.f32.mrf.mxu0
    %v166 = vadd.f32 %v147, %v165
    %167 = vmatmul.f32.gmra.mxu0 %v34
    %v168 = vpop.f32.mrf.mxu0
    %v169 = vadd.f32 %v147, %v168
    %170 = vmatmul.f32.gmra.mxu0 %v35
    %v171 = vpop.f32.mrf.mxu0
    %v172 = vadd.f32 %v147, %v171
    %173 = vmatmul.f32.gmra.mxu0 %v36
    %v174 = vpop.f32.mrf.mxu0
    %v175 = vadd.f32 %v147, %v174
    %176 = vmatmul.f32.gmra.mxu0 %v37
    %v177 = vpop.f32.mrf.mxu0
    %v178 = vadd.f32 %v147, %v177
    %179 = vmatmul.f32.gmra.mxu0 %v38
    %v180 = vpop.f32.mrf.mxu0
    %v181 = vadd.f32 %v147, %v180
    %182 = vmatmul.f32.gmra.mxu0 %v39
    %v183 = vpop.f32.mrf.mxu0
    %v184 = vadd.f32 %v147, %v183
    %185 = vmatmul.f32.gmra.mxu0 %v40
    %v186 = vpop.f32.mrf.mxu0
    %v187 = vadd.f32 %v147, %v186
    %188 = vmatmul.f32.gmra.mxu0 %v41
    %v189 = vpop.f32.mrf.mxu0
    %v190 = vadd.f32 %v147, %v189
    %191 = vmatmul.f32.gmra.mxu0 %v42
    %v192 = vpop.f32.mrf.mxu0
    %v193 = vadd.f32 %v147, %v192
    %194 = vmatmul.f32.gmra.mxu0 %v43
    %v195 = vpop.f32.mrf.mxu0
    %v196 = vadd.f32 %v147, %v195
    %197 = vmatmul.f32.gmra.mxu0 %v44
    %v198 = vpop.f32.mrf.mxu0
    %v199 = vadd.f32 %v147, %v198
    %200 = vmatmul.f32.gmra.mxu0 %v45
    %v201 = vpop.f32.mrf.mxu0
    %v202 = vadd.f32 %v147, %v201
    %203 = vmatmul.f32.gmra.mxu0 %v46
    %v204 = vpop.f32.mrf.mxu0
    %v205 = vadd.f32 %v147, %v204
    %206 = vmatmul.f32.gmra.mxu0 %v47
    %v207 = vpop.f32.mrf.mxu0
    %v208 = vadd.f32 %v147, %v207
    %209 = vmatmul.f32.gmra.mxu0 %v48
    %v210 = vpop.f32.mrf.mxu0
    %v211 = vadd.f32 %v147, %v210
    %212 = vdwg.mxu0
    %v213 = vmax.f32 %v166, 0.0
    %v214 = vmax.f32 %v169, 0.0
    %v215 = vmax.f32 %v172, 0.0
    %v216 = vmax.f32 %v175, 0.0
    %v217 = vmax.f32 %v178, 0.0
    %v218 = vmax.f32 %v181, 0.0
    %v219 = vmax.f32 %v184, 0.0
    %v220 = vmax.f32 %v187, 0.0
    %v221 = vmax.f32 %v190, 0.0
    %v222 = vmax.f32 %v193, 0.0
    %v223 = vmax.f32 %v196, 0.0
    %v224 = vmax.f32 %v199, 0.0
    %v225 = vmax.f32 %v202, 0.0
    %v226 = vmax.f32 %v205, 0.0
    %v227 = vmax.f32 %v208, 0.0
    %v228 = vmax.f32 %v211, 0.0
    %s229 = scalar_lea.vmem [#allocation2], 128
    %v230 = vld [vmem:[%s229] sm:$0xff]
    %v231 = vld [vmem:[%s229 + $0x8] sm:$0xff]
    %v232 = vld [vmem:[%s229 + $0x10] sm:$0xff]
    %v233 = vld [vmem:[%s229 + $0x18] sm:$0xff]
    %v234 = vld [vmem:[%s229 + $0x20] sm:$0xff]
    %v235 = vld [vmem:[%s229 + $0x28] sm:$0xff]
    %v236 = vld [vmem:[%s229 + $0x30] sm:$0xff]
    %v237 = vld [vmem:[%s229 + $0x38] sm:$0xff]
    %v238 = vld [vmem:[%s229 + $0x40] sm:$0xff]
    %v239 = vld [vmem:[%s229 + $0x48] sm:$0xff]
    %v240 = vld [vmem:[%s229 + $0x50] sm:$0xff]
    %v241 = vld [vmem:[%s229 + $0x58] sm:$0xff]
    %v242 = vld [vmem:[%s229 + $0x60] sm:$0xff]
    %v243 = vld [vmem:[%s229 + $0x68] sm:$0xff]
    %v244 = vld [vmem:[%s229 + $0x70] sm:$0xff]
    %v245 = vld [vmem:[%s229 + $0x78] sm:$0xff]
    %246 = vmatpush.msra.mxu0 %v245
    %247 = vmatpush.msra.mxu0 %v244
    %248 = vmatpush.msra.mxu0 %v243
    %249 = vmatpush.msra.mxu0 %v242
    %250 = vmatpush.msra.mxu0 %v241
    %251 = vmatpush.msra.mxu0 %v240
    %252 = vmatpush.msra.mxu0 %v239
    %253 = vmatpush.msra.mxu0 %v238
    %254 = vmatpush.msra.mxu0 %v237
    %255 = vmatpush.msra.mxu0 %v236
    %256 = vmatpush.msra.mxu0 %v235
    %257 = vmatpush.msra.mxu0 %v234
    %258 = vmatpush.msra.mxu0 %v233
    %259 = vmatpush.msra.mxu0 %v232
    %260 = vmatpush.msra.mxu0 %v231
    %261 = vmatpush.msra.mxu0 %v230
    %262 = vmatmul.f32.gmra.mxu0 %v213
    %v263 = vpop.f32.mrf.mxu0
    %v264 = vadd.f32 0.0, %v263
    %265 = vmatmul.f32.gmra.mxu0 %v214
    %v266 = vpop.f32.mrf.mxu0
    %v267 = vadd.f32 0.0, %v266
    %268 = vmatmul.f32.gmra.mxu0 %v215
    %v269 = vpop.f32.mrf.mxu0
    %v270 = vadd.f32 0.0, %v269
    %271 = vmatmul.f32.gmra.mxu0 %v216
    %v272 = vpop.f32.mrf.mxu0
    %v273 = vadd.f32 0.0, %v272
    %274 = vmatmul.f32.gmra.mxu0 %v217
    %v275 = vpop.f32.mrf.mxu0
    %v276 = vadd.f32 0.0, %v275
    %277 = vmatmul.f32.gmra.mxu0 %v218
    %v278 = vpop.f32.mrf.mxu0
    %v279 = vadd.f32 0.0, %v278
    %280 = vmatmul.f32.gmra.mxu0 %v219
    %v281 = vpop.f32.mrf.mxu0
    %v282 = vadd.f32 0.0, %v281
    %283 = vmatmul.f32.gmra.mxu0 %v220
    %v284 = vpop.f32.mrf.mxu0
    %v285 = vadd.f32 0.0, %v284
    %286 = vmatmul.f32.gmra.mxu0 %v221
    %v287 = vpop.f32.mrf.mxu0
    %v288 = vadd.f32 0.0, %v287
    %289 = vmatmul.f32.gmra.mxu0 %v222
    %v290 = vpop.f32.mrf.mxu0
    %v291 = vadd.f32 0.0, %v290
    %292 = vmatmul.f32.gmra.mxu0 %v223
    %v293 = vpop.f32.mrf.mxu0
    %v294 = vadd.f32 0.0, %v293
    %295 = vmatmul.f32.gmra.mxu0 %v224
    %v296 = vpop.f32.mrf.mxu0
    %v297 = vadd.f32 0.0, %v296
    %298 = vmatmul.f32.gmra.mxu0 %v225
    %v299 = vpop.f32.mrf.mxu0
    %v300 = vadd.f32 0.0, %v299
    %301 = vmatmul.f32.gmra.mxu0 %v226
    %v302 = vpop.f32.mrf.mxu0
    %v303 = vadd.f32 0.0, %v302
    %304 = vmatmul.f32.gmra.mxu0 %v227
    %v305 = vpop.f32.mrf.mxu0
    %v306 = vadd.f32 0.0, %v305
    %307 = vmatmul.f32.gmra.mxu0 %v228
    %v308 = vpop.f32.mrf.mxu0
    %v309 = vadd.f32 0.0, %v308
    %310 = vdwg.mxu0
    %s311 = scalar_lea.vmem %s3, 8
    %v312 = vld [vmem:[%s311] sm:$0xff]
    %v313 = vperm.slane %v312, 0
    %314 = vmatpush.msra.mxu0 %v309
    %315 = vmatpush.msra.mxu0 %v306
    %316 = vmatpush.msra.mxu0 %v303
    %317 = vmatpush.msra.mxu0 %v300
    %318 = vmatpush.msra.mxu0 %v297
    %319 = vmatpush.msra.mxu0 %v294
    %320 = vmatpush.msra.mxu0 %v291
    %321 = vmatpush.msra.mxu0 %v288
    %322 = vmatpush.msra.mxu0 %v285
    %323 = vmatpush.msra.mxu0 %v282
    %324 = vmatpush.msra.mxu0 %v279
    %325 = vmatpush.msra.mxu0 %v276
    %326 = vmatpush.msra.mxu0 %v273
    %327 = vmatpush.msra.mxu0 %v270
    %328 = vmatpush.msra.mxu0 %v267
    %329 = vmatpush.msra.mxu0 %v264
    %330 = vmatmul.f32.gmra.mxu0 %v33
    %v331 = vpop.f32.mrf.mxu0
    %v332 = vadd.f32 %v313, %v331
    %333 = vmatmul.f32.gmra.mxu0 %v34
    %v334 = vpop.f32.mrf.mxu0
    %v335 = vadd.f32 %v313, %v334
    %336 = vmatmul.f32.gmra.mxu0 %v35
    %v337 = vpop.f32.mrf.mxu0
    %v338 = vadd.f32 %v313, %v337
    %339 = vmatmul.f32.gmra.mxu0 %v36
    %v340 = vpop.f32.mrf.mxu0
    %v341 = vadd.f32 %v313, %v340
    %342 = vmatmul.f32.gmra.mxu0 %v37
    %v343 = vpop.f32.mrf.mxu0
    %v344 = vadd.f32 %v313, %v343
    %345 = vmatmul.f32.gmra.mxu0 %v38
    %v346 = vpop.f32.mrf.mxu0
    %v347 = vadd.f32 %v313, %v346
    %348 = vmatmul.f32.gmra.mxu0 %v39
    %v349 = vpop.f32.mrf.mxu0
    %v350 = vadd.f32 %v313, %v349
    %351 = vmatmul.f32.gmra.mxu0 %v40
    %v352 = vpop.f32.mrf.mxu0
    %v353 = vadd.f32 %v313, %v352
    %354 = vmatmul.f32.gmra.mxu0 %v41
    %v355 = vpop.f32.mrf.mxu0
    %v356 = vadd.f32 %v313, %v355
    %357 = vmatmul.f32.gmra.mxu0 %v42
    %v358 = vpop.f32.mrf.mxu0
    %v359 = vadd.f32 %v313, %v358
    %360 = vmatmul.f32.gmra.mxu0 %v43
    %v361 = vpop.f32.mrf.mxu0
    %v362 = vadd.f32 %v313, %v361
    %363 = vmatmul.f32.gmra.mxu0 %v44
    %v364 = vpop.f32.mrf.mxu0
    %v365 = vadd.f32 %v313, %v364
    %366 = vmatmul.f32.gmra.mxu0 %v45
    %v367 = vpop.f32.mrf.mxu0
    %v368 = vadd.f32 %v313, %v367
    %369 = vmatmul.f32.gmra.mxu0 %v46
    %v370 = vpop.f32.mrf.mxu0
    %v371 = vadd.f32 %v313, %v370
    %372 = vmatmul.f32.gmra.mxu0 %v47
    %v373 = vpop.f32.mrf.mxu0
    %v374 = vadd.f32 %v313, %v373
    %375 = vmatmul.f32.gmra.mxu0 %v48
    %v376 = vpop.f32.mrf.mxu0
    %v377 = vadd.f32 %v313, %v376
    %378 = vdwg.mxu0
    %v379 = vmax.f32 %v332, 0.0
    %v380 = vmax.f32 %v335, 0.0
    %v381 = vmax.f32 %v338, 0.0
    %v382 = vmax.f32 %v341, 0.0
    %v383 = vmax.f32 %v344, 0.0
    %v384 = vmax.f32 %v347, 0.0
    %v385 = vmax.f32 %v350, 0.0
    %v386 = vmax.f32 %v353, 0.0
    %v387 = vmax.f32 %v356, 0.0
    %v388 = vmax.f32 %v359, 0.0
    %v389 = vmax.f32 %v362, 0.0
    %v390 = vmax.f32 %v365, 0.0
    %v391 = vmax.f32 %v368, 0.0
    %v392 = vmax.f32 %v371, 0.0
    %v393 = vmax.f32 %v374, 0.0
    %v394 = vmax.f32 %v377, 0.0
    %s395 = scalar_lea.vmem [#allocation2], 256
    %v396 = vld [vmem:[%s395] sm:$0xff]
    %v397 = vld [vmem:[%s395 + $0x8] sm:$0xff]
    %v398 = vld [vmem:[%s395 + $0x10] sm:$0xff]
    %v399 = vld [vmem:[%s395 + $0x18] sm:$0xff]
    %v400 = vld [vmem:[%s395 + $0x20] sm:$0xff]
    %v401 = vld [vmem:[%s395 + $0x28] sm:$0xff]
    %v402 = vld [vmem:[%s395 + $0x30] sm:$0xff]
    %v403 = vld [vmem:[%s395 + $0x38] sm:$0xff]
    %v404 = vld [vmem:[%s395 + $0x40] sm:$0xff]
    %v405 = vld [vmem:[%s395 + $0x48] sm:$0xff]
    %v406 = vld [vmem:[%s395 + $0x50] sm:$0xff]
    %v407 = vld [vmem:[%s395 + $0x58] sm:$0xff]
    %v408 = vld [vmem:[%s395 + $0x60] sm:$0xff]
    %v409 = vld [vmem:[%s395 + $0x68] sm:$0xff]
    %v410 = vld [vmem:[%s395 + $0x70] sm:$0xff]
    %v411 = vld [vmem:[%s395 + $0x78] sm:$0xff]
    %412 = vmatpush.msra.mxu0 %v411
    %413 = vmatpush.msra.mxu0 %v410
    %414 = vmatpush.msra.mxu0 %v409
    %415 = vmatpush.msra.mxu0 %v408
    %416 = vmatpush.msra.mxu0 %v407
    %417 = vmatpush.msra.mxu0 %v406
    %418 = vmatpush.msra.mxu0 %v405
    %419 = vmatpush.msra.mxu0 %v404
    %420 = vmatpush.msra.mxu0 %v403
    %421 = vmatpush.msra.mxu0 %v402
    %422 = vmatpush.msra.mxu0 %v401
    %423 = vmatpush.msra.mxu0 %v400
    %424 = vmatpush.msra.mxu0 %v399
    %425 = vmatpush.msra.mxu0 %v398
    %426 = vmatpush.msra.mxu0 %v397
    %427 = vmatpush.msra.mxu0 %v396
    %428 = vmatmul.f32.gmra.mxu0 %v379
    %v429 = vpop.f32.mrf.mxu0
    %v430 = vadd.f32 0.0, %v429
    %431 = vmatmul.f32.gmra.mxu0 %v380
    %v432 = vpop.f32.mrf.mxu0
    %v433 = vadd.f32 0.0, %v432
    %434 = vmatmul.f32.gmra.mxu0 %v381
    %v435 = vpop.f32.mrf.mxu0
    %v436 = vadd.f32 0.0, %v435
    %437 = vmatmul.f32.gmra.mxu0 %v382
    %v438 = vpop.f32.mrf.mxu0
    %v439 = vadd.f32 0.0, %v438
    %440 = vmatmul.f32.gmra.mxu0 %v383
    %v441 = vpop.f32.mrf.mxu0
    %v442 = vadd.f32 0.0, %v441
    %443 = vmatmul.f32.gmra.mxu0 %v384
    %v444 = vpop.f32.mrf.mxu0
    %v445 = vadd.f32 0.0, %v444
    %446 = vmatmul.f32.gmra.mxu0 %v385
    %v447 = vpop.f32.mrf.mxu0
    %v448 = vadd.f32 0.0, %v447
    %449 = vmatmul.f32.gmra.mxu0 %v386
    %v450 = vpop.f32.mrf.mxu0
    %v451 = vadd.f32 0.0, %v450
    %452 = vmatmul.f32.gmra.mxu0 %v387
    %v453 = vpop.f32.mrf.mxu0
    %v454 = vadd.f32 0.0, %v453
    %455 = vmatmul.f32.gmra.mxu0 %v388
    %v456 = vpop.f32.mrf.mxu0
    %v457 = vadd.f32 0.0, %v456
    %458 = vmatmul.f32.gmra.mxu0 %v389
    %v459 = vpop.f32.mrf.mxu0
    %v460 = vadd.f32 0.0, %v459
    %461 = vmatmul.f32.gmra.mxu0 %v390
    %v462 = vpop.f32.mrf.mxu0
    %v463 = vadd.f32 0.0, %v462
    %464 = vmatmul.f32.gmra.mxu0 %v391
    %v465 = vpop.f32.mrf.mxu0
    %v466 = vadd.f32 0.0, %v465
    %467 = vmatmul.f32.gmra.mxu0 %v392
    %v468 = vpop.f32.mrf.mxu0
    %v469 = vadd.f32 0.0, %v468
    %470 = vmatmul.f32.gmra.mxu0 %v393
    %v471 = vpop.f32.mrf.mxu0
    %v472 = vadd.f32 0.0, %v471
    %473 = vmatmul.f32.gmra.mxu0 %v394
    %v474 = vpop.f32.mrf.mxu0
    %v475 = vadd.f32 0.0, %v474
    %476 = vdwg.mxu0
    %s477 = scalar_lea.vmem %s3, 16
    %v478 = vld [vmem:[%s477] sm:$0xff]
    %v479 = vperm.slane %v478, 0
    %480 = vmatpush.msra.mxu0 %v475
    %481 = vmatpush.msra.mxu0 %v472
    %482 = vmatpush.msra.mxu0 %v469
    %483 = vmatpush.msra.mxu0 %v466
    %484 = vmatpush.msra.mxu0 %v463
    %485 = vmatpush.msra.mxu0 %v460
    %486 = vmatpush.msra.mxu0 %v457
    %487 = vmatpush.msra.mxu0 %v454
    %488 = vmatpush.msra.mxu0 %v451
    %489 = vmatpush.msra.mxu0 %v448
    %490 = vmatpush.msra.mxu0 %v445
    %491 = vmatpush.msra.mxu0 %v442
    %492 = vmatpush.msra.mxu0 %v439
    %493 = vmatpush.msra.mxu0 %v436
    %494 = vmatpush.msra.mxu0 %v433
    %495 = vmatpush.msra.mxu0 %v430
    %496 = vmatmul.f32.gmra.mxu0 %v33
    %v497 = vpop.f32.mrf.mxu0
    %v498 = vadd.f32 %v479, %v497
    %499 = vmatmul.f32.gmra.mxu0 %v34
    %v500 = vpop.f32.mrf.mxu0
    %v501 = vadd.f32 %v479, %v500
    %502 = vmatmul.f32.gmra.mxu0 %v35
    %v503 = vpop.f32.mrf.mxu0
    %v504 = vadd.f32 %v479, %v503
    %505 = vmatmul.f32.gmra.mxu0 %v36
    %v506 = vpop.f32.mrf.mxu0
    %v507 = vadd.f32 %v479, %v506
    %508 = vmatmul.f32.gmra.mxu0 %v37
    %v509 = vpop.f32.mrf.mxu0
    %v510 = vadd.f32 %v479, %v509
    %511 = vmatmul.f32.gmra.mxu0 %v38
    %v512 = vpop.f32.mrf.mxu0
    %v513 = vadd.f32 %v479, %v512
    %514 = vmatmul.f32.gmra.mxu0 %v39
    %v515 = vpop.f32.mrf.mxu0
    %v516 = vadd.f32 %v479, %v515
    %517 = vmatmul.f32.gmra.mxu0 %v40
    %v518 = vpop.f32.mrf.mxu0
    %v519 = vadd.f32 %v479, %v518
    %520 = vmatmul.f32.gmra.mxu0 %v41
    %v521 = vpop.f32.mrf.mxu0
    %v522 = vadd.f32 %v479, %v521
    %523 = vmatmul.f32.gmra.mxu0 %v42
    %v524 = vpop.f32.mrf.mxu0
    %v525 = vadd.f32 %v479, %v524
    %526 = vmatmul.f32.gmra.mxu0 %v43
    %v527 = vpop.f32.mrf.mxu0
    %v528 = vadd.f32 %v479, %v527
    %529 = vmatmul.f32.gmra.mxu0 %v44
    %v530 = vpop.f32.mrf.mxu0
    %v531 = vadd.f32 %v479, %v530
    %532 = vmatmul.f32.gmra.mxu0 %v45
    %v533 = vpop.f32.mrf.mxu0
    %v534 = vadd.f32 %v479, %v533
    %535 = vmatmul.f32.gmra.mxu0 %v46
    %v536 = vpop.f32.mrf.mxu0
    %v537 = vadd.f32 %v479, %v536
    %538 = vmatmul.f32.gmra.mxu0 %v47
    %v539 = vpop.f32.mrf.mxu0
    %v540 = vadd.f32 %v479, %v539
    %541 = vmatmul.f32.gmra.mxu0 %v48
    %v542 = vpop.f32.mrf.mxu0
    %v543 = vadd.f32 %v479, %v542
    %544 = vdwg.mxu0
    %545 = vst [vmem:[%s4] sm:$0xff] %v498
    %546 = vst [vmem:[%s4 + $0x8] sm:$0xff] %v501
    %547 = vst [vmem:[%s4 + $0x10] sm:$0xff] %v504
    %548 = vst [vmem:[%s4 + $0x18] sm:$0xff] %v507
    %549 = vst [vmem:[%s4 + $0x20] sm:$0xff] %v510
    %550 = vst [vmem:[%s4 + $0x28] sm:$0xff] %v513
    %551 = vst [vmem:[%s4 + $0x30] sm:$0xff] %v516
    %552 = vst [vmem:[%s4 + $0x38] sm:$0xff] %v519
    %553 = vst [vmem:[%s4 + $0x40] sm:$0xff] %v522
    %554 = vst [vmem:[%s4 + $0x48] sm:$0xff] %v525
    %555 = vst [vmem:[%s4 + $0x50] sm:$0xff] %v528
    %556 = vst [vmem:[%s4 + $0x58] sm:$0xff] %v531
    %557 = vst [vmem:[%s4 + $0x60] sm:$0xff] %v534
    %558 = vst [vmem:[%s4 + $0x68] sm:$0xff] %v537
    %559 = vst [vmem:[%s4 + $0x70] sm:$0xff] %v540
    %560 = vst [vmem:[%s4 + $0x78] sm:$0xff] %v543
    // Predicated region
    $region22: #{_forward_impl.1} parent=1 // pred_check
      _
    $region23: #{_forward_impl.1} parent=1 // pred_check_branch
      %562 = sbr.rel (0) target = $region25
    $region24: #{_forward_impl.1} parent=1 // pred_region
      _
    $region25: #{_forward_impl.1} parent=1 // pred_fallthru
      _
    // Predicated region
    $region26: #{_forward_impl.1} parent=1 // pred_check
      _
    $region27: #{_forward_impl.1} parent=1 // pred_check_branch
      %564 = sbr.rel (0) target = $region29
    $region28: #{_forward_impl.1} parent=1 // pred_region
      _
    $region29: #{_forward_impl.1} parent=1 // pred_fallthru
      _
    %565 = vsyncpa [#allocation3], 1

</llo_original>
